<compile_context>
chip_gen: v5e
topology: v5e:2x2
jax: 0.10.0
libtpu: 0.0.40
codegen_flags: <defaults>
</compile_context>

<pallas_src>
import functools

import jax
import jax.numpy as jnp
from jax.experimental import pallas as pl
from jax.experimental.pallas import tpu as pltpu


def _round_up(x, m):
    return (x + m - 1) // m * m


def _recon_loss_kernel(p_ref, y_pred_ref, y_true_ref, out_ref, *, batch, tile_b):
    """One lane-dense batch tile: weighted BCE, reduced over the steps (sublane) axis."""
    p = p_ref[...].astype(jnp.float32)        # (S, TILE_B) halting probs
    x = y_pred_ref[...].astype(jnp.float32)   # (S, TILE_B) logits
    y = y_true_ref[...].astype(jnp.float32)   # (1, TILE_B) targets, broadcasts over S

    # Numerically stable BCE-with-logits, elementwise (reduction="none"):
    #   bce(x, y) = max(x, 0) - x*y + log(1 + exp(-|x|))
    bce = jnp.maximum(x, 0.0) - x * y + jnp.log1p(jnp.exp(-jnp.abs(x)))
    weighted = p * bce                                   # (S, TILE_B)

    # Only the cheap sublane (steps) reduction per tile; cross-lane reduce + 1/batch scale
    # are deferred to the wrapper.
    partial = jnp.sum(weighted, axis=0, keepdims=True)   # (1, TILE_B) per-lane partial sums

    i = pl.program_id(0)
    last = pl.num_programs(0) - 1

    # Interior tiles: every lane is a real batch column -> unmasked lane-dense store.
    @pl.when(i != last)
    def _():
        out_ref[...] = partial

    # Edge tile: zero out lanes past the true batch; their VMEM contents come from a partial
    # block DMA and are undefined (possibly Inf/NaN).
    @pl.when(i == last)
    def _():
        lane = jax.lax.broadcasted_iota(jnp.int32, partial.shape, 1)
        valid = (i * tile_b + lane) < batch
        out_ref[...] = jnp.where(valid, partial, 0.0)


def _pick_tile_b(max_steps, b_rounded, itemsize, target_tile_bytes=8 * 1024 * 1024):
    # Steady-state streamed VMEM footprint = 2 big inputs x 2 pipeline buffers x tile bytes.
    # ~8 MiB per input tile -> 32 MiB of streamed buffers, comfortably under the 48 MiB
    # scoped limit requested below (v7x: 64 MiB physical per TC; v5e/v6e: 128 MiB).
    lanes = (target_tile_bytes // (max_steps * itemsize)) // 128 * 128
    lanes = max(128, lanes)
    # Keep >= 2 grid steps whenever possible so both TensorCores (v7x megacore) get work
    # and the DMA pipeline actually double-buffers.
    if b_rounded > 128:
        lanes = min(lanes, _round_up(pl.cdiv(b_rounded, 2), 128))
    return min(lanes, b_rounded)


@jax.jit
def reconstruction_loss(p, y_pred, y_true):
    """p: (max_steps, batch), y_pred: (max_steps, batch) logits, y_true: (batch,) in {0,1}.
    Returns scalar f32 loss. Inputs may be f32 or bf16 (streamed as bf16 either way)."""
    max_steps, batch = p.shape
    assert y_pred.shape == (max_steps, batch)
    assert y_true.shape == (batch,)

    # HBM-bandwidth-bound on every generation: stream the two big arrays as bf16.
    # (When fused with the upstream producer this halves the streamed bytes; the kernel
    # upcasts to f32 and accumulates in f32, so only ~3-digit input rounding remains.)
    p = p.astype(jnp.bfloat16)
    y_pred = y_pred.astype(jnp.bfloat16)
    y_true2d = y_true.astype(jnp.float32).reshape(1, batch)

    b_rounded = _round_up(batch, 128)   # lane-dense OUTPUT width only; inputs are NOT padded
    itemsize = p.dtype.itemsize         # 2 (bf16)
    tile_b = _pick_tile_b(max_steps, b_rounded, itemsize)
    num_tiles = pl.cdiv(b_rounded, tile_b)

    kernel = functools.partial(_recon_loss_kernel, batch=batch, tile_b=tile_b)

    cost = pl.CostEstimate(
        flops=7 * max_steps * batch,
        transcendentals=2 * max_steps * batch,
        bytes_accessed=(2 * max_steps * batch * itemsize      # p + y_pred reads
                        + batch * y_true2d.dtype.itemsize     # y_true read
                        + b_rounded * 4),                     # partials write
    )

    partials = pl.pallas_call(
        kernel,
        out_shape=jax.ShapeDtypeStruct((1, b_rounded), jnp.float32),
        grid=(num_tiles,),
        in_specs=[
            pl.BlockSpec((max_steps, tile_b), lambda i: (0, i)),
            pl.BlockSpec((max_steps, tile_b), lambda i: (0, i)),
            pl.BlockSpec((1, tile_b), lambda i: (0, i)),
        ],
        out_specs=pl.BlockSpec((1, tile_b), lambda i: (0, i)),
        compiler_params=pltpu.CompilerParams(
            dimension_semantics=("parallel",),
            vmem_limit_bytes=48 * 1024 * 1024,
        ),
        cost_estimate=cost,
    )(p, y_pred, y_true2d)

    # Final cross-lane reduce + scale by the TRUE batch size. Padded output lanes
    # (batch .. b_rounded) carry exact zeros written by the edge-tile mask.
    return jnp.sum(partials) * (1.0 / batch)


def _reference(p, y_pred, y_true):
    # Pure-JAX f32 reference mirroring the PyTorch loop exactly.
    p = p.astype(jnp.float32)
    x = y_pred.astype(jnp.float32)
    y = y_true.astype(jnp.float32)
    bce = jnp.maximum(x, 0.0) - x * y[None, :] + jnp.log1p(jnp.exp(-jnp.abs(x)))
    return jnp.sum(jnp.mean(p * bce, axis=1))


if __name__ == "__main__":
    key = jax.random.PRNGKey(0)

    def run_case(key, max_steps, batch):
        k1, k2, k3 = jax.random.split(key, 3)
        # Halting probabilities: softmax over steps so each column sums to 1.
        p = jax.nn.softmax(jax.random.normal(k1, (max_steps, batch)), axis=0).astype(jnp.float32)
        y_pred = jax.random.normal(k2, (max_steps, batch), dtype=jnp.float32)
        y_true = jax.random.bernoulli(k3, 0.5, (batch,)).astype(jnp.float32)
        loss = jax.block_until_ready(reconstruction_loss(p, y_pred, y_true))
        ref = jax.block_until_ready(_reference(p, y_pred, y_true))
        # Tolerance reflects bf16 streaming of p / y_pred (f32 accumulation in-kernel).
        assert jnp.allclose(loss, ref, atol=2e-2, rtol=2e-2), (max_steps, batch, loss, ref)

    k_a, k_b = jax.random.split(key)
    run_case(k_a, max_steps=8, batch=16)    # single (edge-masked) tile
    run_case(k_b, max_steps=8, batch=300)   # interior unmasked tile + partial edge tile

    print("KERNEL_OK")
</pallas_src>

<mosaic_0001>
module attributes {stable_mosaic.version = 11 : i64} {
  func.func @_recon_loss_kernel(%arg0: i32, %arg1: memref<8x128xbf16, #tpu.memory_space<vmem>>, %arg2: memref<8x128xbf16, #tpu.memory_space<vmem>>, %arg3: memref<1x128xf32, #tpu.memory_space<vmem>>, %arg4: memref<1x128xf32, #tpu.memory_space<vmem>>) attributes {dimension_semantics = [#tpu.dimension_semantics<parallel>], iteration_bounds = array<i64: 1>, scalar_prefetch = 0 : i64, scratch_operands = 0 : i64, tpu.core_type = #tpu.core_type<tc>, window_params = [{transform_indices = @transform_0, window_bounds = array<i64: 8, 128>}, {transform_indices = @transform_1, window_bounds = array<i64: 8, 128>}, {transform_indices = @transform_2, window_bounds = array<i64: 1, 128>}, {transform_indices = @transform_3, window_bounds = array<i64: 1, 128>}]} {
    %c0 = arith.constant 0 : index
    %c0_0 = arith.constant 0 : index
    %0 = vector.load %arg1[%c0, %c0_0] : memref<8x128xbf16, #tpu.memory_space<vmem>>, vector<8x128xbf16>
    %1 = arith.extf %0 : vector<8x128xbf16> to vector<8x128xf32>
    %c0_1 = arith.constant 0 : index
    %c0_2 = arith.constant 0 : index
    %2 = vector.load %arg2[%c0_1, %c0_2] : memref<8x128xbf16, #tpu.memory_space<vmem>>, vector<8x128xbf16>
    %3 = arith.extf %2 : vector<8x128xbf16> to vector<8x128xf32>
    %c0_3 = arith.constant 0 : index
    %c0_4 = arith.constant 0 : index
    %4 = vector.load %arg3[%c0_3, %c0_4] : memref<1x128xf32, #tpu.memory_space<vmem>>, vector<1x128xf32>
    %cst = arith.constant 0.000000e+00 : f32
    %5 = vector.broadcast %cst : f32 to vector<8x128xf32>
    %6 = arith.maximumf %3, %5 : vector<8x128xf32>
    %7 = vector.broadcast %4 : vector<1x128xf32> to vector<8x128xf32>
    %8 = arith.mulf %3, %7 : vector<8x128xf32>
    %9 = arith.subf %6, %8 : vector<8x128xf32>
    %10 = math.absf %3 : vector<8x128xf32>
    %cst_5 = arith.constant 0.000000e+00 : f32
    %11 = vector.broadcast %cst_5 : f32 to vector<8x128xf32>
    %12 = arith.subf %11, %10 : vector<8x128xf32>
    %13 = math.exp %12 : vector<8x128xf32>
    %14 = math.log1p %13 : vector<8x128xf32>
    %15 = arith.addf %9, %14 : vector<8x128xf32>
    %16 = arith.mulf %1, %15 : vector<8x128xf32>
    %cst_6 = arith.constant dense<0.000000e+00> : vector<128xf32>
    %17 = vector.multi_reduction <add>, %16, %cst_6 [0] : vector<8x128xf32> to vector<128xf32>
    %18 = vector.shape_cast %17 : vector<128xf32> to vector<1x128xf32>
    %c0_i32 = arith.constant 0 : i32
    %19 = arith.cmpi ne, %arg0, %c0_i32 : i32
    %20 = arith.extui %19 : i1 to i32
    %c0_i32_7 = arith.constant 0 : i32
    %21 = arith.cmpi ne, %20, %c0_i32_7 : i32
    scf.if %21 {
      %c0_10 = arith.constant 0 : index
      %c0_11 = arith.constant 0 : index
      %25 = vector.load %arg4[%c0_10, %c0_11] : memref<1x128xf32, #tpu.memory_space<vmem>>, vector<1x128xf32>
      tpu.vector_store %arg4[%c0_10, %c0_11], %18 {strides = array<i32>} : memref<1x128xf32, #tpu.memory_space<vmem>>, vector<1x128xf32>,
    } else {
    }
    %c0_i32_8 = arith.constant 0 : i32
    %22 = arith.cmpi eq, %arg0, %c0_i32_8 : i32
    %23 = arith.extui %22 : i1 to i32
    %c0_i32_9 = arith.constant 0 : i32
    %24 = arith.cmpi ne, %23, %c0_i32_9 : i32
    scf.if %24 {
      %25 = tpu.iota {dimensions = array<i32: 1>} : vector<1x128xi32>
      %c128_i32 = arith.constant 128 : i32
      %26 = arith.muli %arg0, %c128_i32 : i32
      %27 = vector.broadcast %26 : i32 to vector<1x128xi32>
      %28 = arith.addi %27, %25 : vector<1x128xi32>
      %c16_i32 = arith.constant 16 : i32
      %29 = vector.broadcast %c16_i32 : i32 to vector<1x128xi32>
      %30 = arith.cmpi slt, %28, %29 : vector<1x128xi32>
      %cst_10 = arith.constant 0.000000e+00 : f32
      %31 = vector.broadcast %cst_10 : f32 to vector<1x128xf32>
      %32 = arith.select %30, %18, %31 : vector<1x128xi1>, vector<1x128xf32>
      %c0_11 = arith.constant 0 : index
      %c0_12 = arith.constant 0 : index
      %33 = vector.load %arg4[%c0_11, %c0_12] : memref<1x128xf32, #tpu.memory_space<vmem>>, vector<1x128xf32>
      tpu.vector_store %arg4[%c0_11, %c0_12], %32 {strides = array<i32>} : memref<1x128xf32, #tpu.memory_space<vmem>>, vector<1x128xf32>,
    } else {
    }
    return
  }
  func.func @transform_0(%arg0: i32) -> (i32, i32) {
    %c0_i32 = arith.constant 0 : i32
    %c0_i32_0 = arith.constant 0 : i32
    return %c0_i32, %arg0 : i32, i32
  }
  func.func @transform_1(%arg0: i32) -> (i32, i32) {
    %c0_i32 = arith.constant 0 : i32
    %c0_i32_0 = arith.constant 0 : i32
    return %c0_i32, %arg0 : i32, i32
  }
  func.func @transform_2(%arg0: i32) -> (i32, i32) {
    %c0_i32 = arith.constant 0 : i32
    %c0_i32_0 = arith.constant 0 : i32
    return %c0_i32, %arg0 : i32, i32
  }
  func.func @transform_3(%arg0: i32) -> (i32, i32) {
    %c0_i32 = arith.constant 0 : i32
    %c0_i32_0 = arith.constant 0 : i32
    return %c0_i32, %arg0 : i32, i32
  }
}

</mosaic_0001>

<llo_original>
// kernel: reconstruction_loss.1
$region0: #{reconstruction_loss.1}
  #allocation0 [shape = 'u32[]', space=smem, size = 0x4, offset = 0x4, fixed_abs, tag = 'smem constant byte address 0x4 - core index']
  #allocation1 [shape = 'u32[72,128]{1,0:T(1,128)}', space=vmem, size = 0x9000, scoped, tag = 'internal scratch']
  %s0 = inlined_call_operand.vmem [shape: bf16[8,16], index: 0, kind: input, shape index: {}]
  %s1 = inlined_call_operand.vmem [shape: bf16[8,16], index: 1, kind: input, shape index: {}]
  %s2 = inlined_call_operand.vmem [shape: f32[1,16], index: 2, kind: input, shape index: {}]
  %s3 = inlined_call_operand.vmem [shape: f32[1,128], index: 3, kind: output, shape index: {}]
  %s4 = sld [smem:[#allocation0]]
  $region30: #{reconstruction_loss.1} parent=0
    _
  %s6 = ssub.s32 1, %s4
  %s7 = scalar_select 0, %s6, %s4
  // Predicated region
  $region2: #{reconstruction_loss.1} parent=0 // pred_check
    _
  $region3: #{reconstruction_loss.1} parent=0 // pred_check_branch
    %9 = sbr.rel (0) target = $region5
  $region4: #{reconstruction_loss.1} parent=0 // pred_region
    _
  $region5: #{reconstruction_loss.1} parent=0 // pred_fallthru
    _
  // Predicated region
  $region6: #{reconstruction_loss.1} parent=0 // pred_check
    _
  $region7: #{reconstruction_loss.1} parent=0 // pred_check_branch
    %11 = sbr.rel (0) target = $region9
  $region8: #{reconstruction_loss.1} parent=0 // pred_region
    _
  $region9: #{reconstruction_loss.1} parent=0 // pred_fallthru
    _
  // Predicated region
  $region10: #{reconstruction_loss.1} parent=0 // pred_check
    _
  $region11: #{reconstruction_loss.1} parent=0 // pred_check_branch
    %13 = sbr.rel (0) target = $region13
  $region12: #{reconstruction_loss.1} parent=0 // pred_region
    _
  $region13: #{reconstruction_loss.1} parent=0 // pred_fallthru
    _
  %v14 = vld [vmem:[%s0] sm:$0xf]
  %v15 = vunpack.c.l.bf16 %v14
  %v16 = vld [vmem:[%s1] sm:$0xf]
  %v17 = vunpack.c.l.bf16 %v16
  %v18 = vld [vmem:[%s2] sm:$0x1]
  %v19 = vmax.f32 %v17, 0.0
  %v21 = vperm.slane %v18, 0
  %v23 = vmul.f32 %v17, %v21
  %v24 = vsub.f32 %v19, %v23
  %v25 = vand.u32 2147483647, %v17
  %v26 = vsub.f32 0.0, %v25
  %v27 = vmul.f32 %v26, 1.442695
  %v28 = vpow.pop %v27
  %v29 = vadd.f32 %v28, 1.0
  %v30 = vlog2.pop %v29
  %v31 = vmul.f32 %v30, 0.6931472
  %v32 = vmul.f32 -0.5, %v28
  %v33 = vadd.f32 %v32, 1.0
  %v34 = vmul.f32 %v33, %v28
  %v35 = vand.u32 2147483647, %v28
  %vm36 = vcmp.lt.f32.partialorder %v35, 0.0004427343
  %v37 = vsel %vm36, %v34, %v31
  %v38 = vadd.f32 %v24, %v37
  %v39 = vmul.f32 %v15, %v38
  %v40 = vrot.slane %v39, 4
  %v41 = vadd.f32 %v39, %v40
  %v42 = vrot.slane %v41, 2
  %v43 = vadd.f32 %v41, %v42
  %v44 = vrot.slane %v43, 1
  %v45 = vadd.f32 %v43, %v44
  %p46 = scmp.ne.s32.totalorder 0, 0
  // Predicated region
  $region14: #{reconstruction_loss.1} parent=0 // pred_check
    %p47 = pneg %p46
  $region15: #{reconstruction_loss.1} parent=0 // pred_check_branch
    %49 = sbr.rel (%p47) target = $region17
  $region16: #{reconstruction_loss.1} parent=0 // pred_region
    %50 = vst [vmem:[%s3] sm:$0x1] %v45
  $region17: #{reconstruction_loss.1} parent=0 // pred_fallthru
    _
  %p51 = scmp.eq.s32.totalorder 0, 0
  // Predicated region
  $region18: #{reconstruction_loss.1} parent=0 // pred_check
    %p52 = pneg %p51
  $region19: #{reconstruction_loss.1} parent=0 // pred_check_branch
    %54 = sbr.rel (%p52) target = $region21
  $region20: #{reconstruction_loss.1} parent=0 // pred_region
    %v55 = vlaneseq
    %v56 = vand.u32 %v55, 127
    %s57 = smul.u32 0, 128
    %v58 = vstv %s57
    %v59 = vadd.s32 %v58, %v56
    %vm60 = vcmp.lt.s32.totalorder %v59, 16
    %v61 = vsel %vm60, %v45, 0.0
    %62 = vst [vmem:[%s3] sm:$0x1] %v61
  $region21: #{reconstruction_loss.1} parent=0 // pred_fallthru
    _
  // Predicated region
  $region22: #{reconstruction_loss.1} parent=0 // pred_check
    _
  $region23: #{reconstruction_loss.1} parent=0 // pred_check_branch
    %64 = sbr.rel (0) target = $region25
  $region24: #{reconstruction_loss.1} parent=0 // pred_region
    _
  $region25: #{reconstruction_loss.1} parent=0 // pred_fallthru
    _
  // Predicated region
  $region26: #{reconstruction_loss.1} parent=0 // pred_check
    _
  $region27: #{reconstruction_loss.1} parent=0 // pred_check_branch
    %66 = sbr.rel (0) target = $region29
  $region28: #{reconstruction_loss.1} parent=0 // pred_region
    _
  $region29: #{reconstruction_loss.1} parent=0 // pred_fallthru
    _

</llo_original>
